<compile_context>
chip_gen: v7x
topology: tpu7x:2x2x1
jax: 0.10.0
libtpu: 0.0.40
codegen_flags: <defaults>
</compile_context>

<pallas_src>
import jax
import jax.numpy as jnp
from jax.experimental import pallas as pl
from jax.experimental.pallas import tpu as pltpu

BN_EPS = 1e-5
LANES = 128


def _round_up(x, m):
    return (x + m - 1) // m * m


# --------------------------------------------------------------------------
# Kernel
# --------------------------------------------------------------------------
def _fold_kernel(emb_ref, w1p_ref, w1n_ref, b1_ref, gamma_ref, beta_ref,
                 w2_ref, b2_ref, o_ref):
    """Fused fold of (Linear -> BN(train) -> ReLU -> Linear) over N-1 steps.

    emb_ref:            [N, B, FP]  row i = [mean_i | logsigma_i | 0-pad]
    w1p_ref:            [FP, FP]    zero-pad of W1[:2D, :]  ("prev" split-K half)
    w1n_ref:            [FP, FP]    zero-pad of W1[2D:, :]  ("new"  split-K half)
    b1/gamma/beta/b2:   [1, FP]
    w2_ref:             [FP, FP]
    o_ref:              [B, FP]
    """
    n = emb_ref.shape[0]
    inv_b = 1.0 / emb_ref.shape[1]

    # Weights load once; they stay live across the whole fold (tiny: 3x64 KiB).
    w1p = w1p_ref[...]
    w1n = w1n_ref[...]
    b1 = b1_ref[...]
    gamma = gamma_ref[...]
    beta = beta_ref[...]
    w2 = w2_ref[...]
    b2 = b2_ref[...]

    carry = emb_ref[0]                       # prior: [mean_0 | logsigma_0 | 0]
    # N is a trace-time constant; a static unroll keeps the whole fold inside
    # one kernel invocation with zero per-step launch/grid overhead.
    # TODO(synk): for large N, switch to a grid=(N-1,) "arbitrary" fold with a
    # VMEM-carried posterior instead of a full static unroll.
    for i in range(1, n):
        new = emb_ref[i]                     # [B, FP]
        # First Linear as two split-K MXU dots (no [B, 4D] concat needed).
        h = (jnp.dot(carry, w1p, preferred_element_type=jnp.float32)
             + jnp.dot(new, w1n, preferred_element_type=jnp.float32)
             + b1)
        # BatchNorm1d, training-mode batch stats, single reduction pass.
        mu = jnp.sum(h, axis=0, keepdims=True) * inv_b
        ex2 = jnp.sum(h * h, axis=0, keepdims=True) * inv_b
        var = ex2 - mu * mu                  # biased variance (PyTorch train)
        h = (h - mu) * jax.lax.rsqrt(var + BN_EPS) * gamma + beta
        h = jnp.maximum(h, 0.0)              # ReLU (VPU)
        # Second Linear; padded output lanes stay exactly zero.
        carry = jnp.dot(h, w2, preferred_element_type=jnp.float32) + b2
    o_ref[...] = carry.astype(o_ref.dtype)


@jax.jit
def _run_fold(emb, w1p, w1n, b1, gamma, beta, w2, b2):
    _, b, fp = emb.shape
    vmem = pl.BlockSpec(memory_space=pltpu.MemorySpace.VMEM)
    return pl.pallas_call(
        _fold_kernel,
        out_shape=jax.ShapeDtypeStruct((b, fp), jnp.float32),
        in_specs=[vmem] * 8,
        out_specs=vmem,
    )(emb, w1p, w1n, b1, gamma, beta, w2, b2)


# --------------------------------------------------------------------------
# Parameters
# --------------------------------------------------------------------------
def init_params(key, embed_dim):
    """PyTorch-shaped params (weights stored pre-transposed as [in, out])."""
    k1, k2, k3, k4 = jax.random.split(key, 4)
    in1, out1 = 4 * embed_dim, 2 * embed_dim
    in2, out2 = 2 * embed_dim, 2 * embed_dim
    bound1 = 1.0 / jnp.sqrt(in1)
    bound2 = 1.0 / jnp.sqrt(in2)
    return {
        "w1": jax.random.uniform(k1, (in1, out1), jnp.float32, -bound1, bound1),
        "b1": jax.random.uniform(k2, (1, out1), jnp.float32, -bound1, bound1),
        "gamma": jnp.ones((1, out1), jnp.float32),
        "beta": jnp.zeros((1, out1), jnp.float32),
        "w2": jax.random.uniform(k3, (in2, out2), jnp.float32, -bound2, bound2),
        "b2": jax.random.uniform(k4, (1, out2), jnp.float32, -bound2, bound2),
    }


def pack_params(params, embed_dim):
    """Zero-pad params to the lane-dense kernel layout (width FP, K split)."""
    h = 2 * embed_dim
    fp = _round_up(h, LANES)

    def pad_mat(m):
        out = jnp.zeros((fp, fp), jnp.float32)
        return out.at[: m.shape[0], : m.shape[1]].set(m)

    def pad_row(v):
        out = jnp.zeros((1, fp), jnp.float32)
        return out.at[:, : v.shape[1]].set(v)

    w1 = params["w1"]                               # [4D, 2D]
    return {
        "w1_prev": pad_mat(w1[:h, :]),              # [FP, FP]
        "w1_new": pad_mat(w1[h:, :]),               # [FP, FP]
        "b1": pad_row(params["b1"]),
        "gamma": pad_row(params["gamma"]),          # padded gammas are 0
        "beta": pad_row(params["beta"]),
        "w2": pad_mat(params["w2"]),                # [FP, FP]
        "b2": pad_row(params["b2"]),
    }


# --------------------------------------------------------------------------
# Forward
# --------------------------------------------------------------------------
def pcme_mlp_combiner_forward(packed, embed_dim, embeddings):
    """embeddings: list of dicts with 'embedding' and 'logsigma', each [B, D]."""
    assert len(embeddings) >= 2, "fold needs at least two embedding dicts"
    means = jnp.stack([e["embedding"] for e in embeddings]).astype(jnp.float32)
    logsig = jnp.stack([e["logsigma"] for e in embeddings]).astype(jnp.float32)
    n, b, d = means.shape
    fp = packed["w2"].shape[1]
    parts = [means, logsig]
    pad = fp - 2 * d
    if pad > 0:
        parts.append(jnp.zeros((n, b, pad), jnp.float32))
    emb = jnp.concatenate(parts, axis=-1)           # [N, B, FP], built once
    out = _run_fold(emb, packed["w1_prev"], packed["w1_new"], packed["b1"],
                    packed["gamma"], packed["beta"], packed["w2"], packed["b2"])
    posterior_mean = out[:, :embed_dim]
    posterior_variance = out[:, embed_dim:2 * embed_dim]
    # log_z is torch.zeros(B) at every step; their sum is zeros(B).
    log_z_total = jnp.zeros((b,), jnp.float32)
    return posterior_mean, posterior_variance, log_z_total


# --------------------------------------------------------------------------
# Pure-JAX reference (unpadded, per-step concat) for a correctness check.
# --------------------------------------------------------------------------
def _reference_forward(params, embed_dim, embeddings):
    prior_m = embeddings[0]["embedding"]
    prior_v = embeddings[0]["logsigma"]
    for i in range(1, len(embeddings)):
        x = jnp.concatenate(
            [prior_m, prior_v,
             embeddings[i]["embedding"], embeddings[i]["logsigma"]], axis=1)
        h = x @ params["w1"] + params["b1"]
        mu = jnp.mean(h, axis=0, keepdims=True)
        var = jnp.mean((h - mu) ** 2, axis=0, keepdims=True)
        h = (h - mu) / jnp.sqrt(var + BN_EPS) * params["gamma"] + params["beta"]
        h = jnp.maximum(h, 0.0)
        rez = h @ params["w2"] + params["b2"]
        prior_m = rez[:, :embed_dim]
        prior_v = rez[:, embed_dim:2 * embed_dim]
    return prior_m, prior_v


# --------------------------------------------------------------------------
if __name__ == "__main__":
    B = 8          # batch
    D = 32         # config.model.embed_size
    N_EMB = 3      # number of embedding dicts in the list

    key = jax.random.PRNGKey(0)
    key_params, key_data = jax.random.split(key)
    params = init_params(key_params, D)
    packed = pack_params(params, D)

    embeddings = []
    dk = key_data
    for _ in range(N_EMB):
        dk, k_m, k_s = jax.random.split(dk, 3)
        embeddings.append({
            "embedding": jax.random.normal(k_m, (B, D), jnp.float32),
            "logsigma": jax.random.normal(k_s, (B, D), jnp.float32),
        })

    post_mean, post_var, log_z_total = pcme_mlp_combiner_forward(
        packed, D, embeddings)
    jax.block_until_ready((post_mean, post_var, log_z_total))

    assert post_mean.shape == (B, D)
    assert post_var.shape == (B, D)
    assert log_z_total.shape == (B,)
    assert bool(jnp.all(log_z_total == 0.0))

    ref_mean, ref_var = _reference_forward(params, D, embeddings)
    assert bool(jnp.allclose(post_mean, ref_mean, rtol=2e-2, atol=2e-2))
    assert bool(jnp.allclose(post_var, ref_var, rtol=2e-2, atol=2e-2))

    print("KERNEL_OK")
</pallas_src>

<mosaic_0001>
module attributes {stable_mosaic.version = 11 : i64} {
  func.func @_fold_kernel(%arg0: memref<3x8x128xf32, #tpu.memory_space<vmem>>, %arg1: memref<128x128xf32, #tpu.memory_space<vmem>>, %arg2: memref<128x128xf32, #tpu.memory_space<vmem>>, %arg3: memref<1x128xf32, #tpu.memory_space<vmem>>, %arg4: memref<1x128xf32, #tpu.memory_space<vmem>>, %arg5: memref<1x128xf32, #tpu.memory_space<vmem>>, %arg6: memref<128x128xf32, #tpu.memory_space<vmem>>, %arg7: memref<1x128xf32, #tpu.memory_space<vmem>>, %arg8: memref<8x128xf32, #tpu.memory_space<vmem>>) attributes {dimension_semantics = [], scalar_prefetch = 0 : i64, scratch_operands = 0 : i64, tpu.core_type = #tpu.core_type<tc>} {
    %c0 = arith.constant 0 : index
    %c0_0 = arith.constant 0 : index
    %0 = vector.load %arg1[%c0, %c0_0] : memref<128x128xf32, #tpu.memory_space<vmem>>, vector<128x128xf32>
    %c0_1 = arith.constant 0 : index
    %c0_2 = arith.constant 0 : index
    %1 = vector.load %arg2[%c0_1, %c0_2] : memref<128x128xf32, #tpu.memory_space<vmem>>, vector<128x128xf32>
    %c0_3 = arith.constant 0 : index
    %c0_4 = arith.constant 0 : index
    %2 = vector.load %arg3[%c0_3, %c0_4] : memref<1x128xf32, #tpu.memory_space<vmem>>, vector<1x128xf32>
    %c0_5 = arith.constant 0 : index
    %c0_6 = arith.constant 0 : index
    %3 = vector.load %arg4[%c0_5, %c0_6] : memref<1x128xf32, #tpu.memory_space<vmem>>, vector<1x128xf32>
    %c0_7 = arith.constant 0 : index
    %c0_8 = arith.constant 0 : index
    %4 = vector.load %arg5[%c0_7, %c0_8] : memref<1x128xf32, #tpu.memory_space<vmem>>, vector<1x128xf32>
    %c0_9 = arith.constant 0 : index
    %c0_10 = arith.constant 0 : index
    %5 = vector.load %arg6[%c0_9, %c0_10] : memref<128x128xf32, #tpu.memory_space<vmem>>, vector<128x128xf32>
    %c0_11 = arith.constant 0 : index
    %c0_12 = arith.constant 0 : index
    %6 = vector.load %arg7[%c0_11, %c0_12] : memref<1x128xf32, #tpu.memory_space<vmem>>, vector<1x128xf32>
    %c0_13 = arith.constant 0 : index
    %c0_14 = arith.constant 0 : index
    %c0_15 = arith.constant 0 : index
    %7 = vector.load %arg0[%c0_13, %c0_14, %c0_15] : memref<3x8x128xf32, #tpu.memory_space<vmem>>, vector<1x8x128xf32>
    %8 = vector.shape_cast %7 : vector<1x8x128xf32> to vector<8x128xf32>
    %c1 = arith.constant 1 : index
    %c0_16 = arith.constant 0 : index
    %c0_17 = arith.constant 0 : index
    %9 = vector.load %arg0[%c1, %c0_16, %c0_17] : memref<3x8x128xf32, #tpu.memory_space<vmem>>, vector<1x8x128xf32>
    %10 = vector.shape_cast %9 : vector<1x8x128xf32> to vector<8x128xf32>
    %cst = arith.constant dense<0.000000e+00> : vector<8x128xf32>
    %11 = tpu.matmul %8, %0, %cst {dimension_numbers = #tpu.dot_dimension_numbers<[1], [0], [0], [1], [0, 0, 1, 1], [], []>} : vector<8x128xf32>, vector<128x128xf32>, vector<8x128xf32> -> vector<8x128xf32>
    %cst_18 = arith.constant dense<0.000000e+00> : vector<8x128xf32>
    %12 = tpu.matmul %10, %1, %cst_18 {dimension_numbers = #tpu.dot_dimension_numbers<[1], [0], [0], [1], [0, 0, 1, 1], [], []>} : vector<8x128xf32>, vector<128x128xf32>, vector<8x128xf32> -> vector<8x128xf32>
    %13 = arith.addf %11, %12 : vector<8x128xf32>
    %14 = vector.broadcast %2 : vector<1x128xf32> to vector<8x128xf32>
    %15 = arith.addf %13, %14 : vector<8x128xf32>
    %cst_19 = arith.constant dense<0.000000e+00> : vector<128xf32>
    %16 = vector.multi_reduction <add>, %15, %cst_19 [0] : vector<8x128xf32> to vector<128xf32>
    %17 = vector.shape_cast %16 : vector<128xf32> to vector<1x128xf32>
    %cst_20 = arith.constant 1.250000e-01 : f32
    %18 = vector.broadcast %cst_20 : f32 to vector<1x128xf32>
    %19 = arith.mulf %17, %18 : vector<1x128xf32>
    %20 = arith.mulf %15, %15 : vector<8x128xf32>
    %cst_21 = arith.constant dense<0.000000e+00> : vector<128xf32>
    %21 = vector.multi_reduction <add>, %20, %cst_21 [0] : vector<8x128xf32> to vector<128xf32>
    %22 = vector.shape_cast %21 : vector<128xf32> to vector<1x128xf32>
    %cst_22 = arith.constant 1.250000e-01 : f32
    %23 = vector.broadcast %cst_22 : f32 to vector<1x128xf32>
    %24 = arith.mulf %22, %23 : vector<1x128xf32>
    %25 = arith.mulf %19, %19 : vector<1x128xf32>
    %26 = arith.subf %24, %25 : vector<1x128xf32>
    %27 = vector.broadcast %19 : vector<1x128xf32> to vector<8x128xf32>
    %28 = arith.subf %15, %27 : vector<8x128xf32>
    %cst_23 = arith.constant 9.99999974E-6 : f32
    %29 = vector.broadcast %cst_23 : f32 to vector<1x128xf32>
    %30 = arith.addf %26, %29 : vector<1x128xf32>
    %31 = math.rsqrt %30 : vector<1x128xf32>
    %32 = vector.broadcast %31 : vector<1x128xf32> to vector<8x128xf32>
    %33 = arith.mulf %28, %32 : vector<8x128xf32>
    %34 = vector.broadcast %3 : vector<1x128xf32> to vector<8x128xf32>
    %35 = arith.mulf %33, %34 : vector<8x128xf32>
    %36 = vector.broadcast %4 : vector<1x128xf32> to vector<8x128xf32>
    %37 = arith.addf %35, %36 : vector<8x128xf32>
    %cst_24 = arith.constant 0.000000e+00 : f32
    %38 = vector.broadcast %cst_24 : f32 to vector<8x128xf32>
    %39 = arith.maximumf %37, %38 : vector<8x128xf32>
    %cst_25 = arith.constant dense<0.000000e+00> : vector<8x128xf32>
    %40 = tpu.matmul %39, %5, %cst_25 {dimension_numbers = #tpu.dot_dimension_numbers<[1], [0], [0], [1], [0, 0, 1, 1], [], []>} : vector<8x128xf32>, vector<128x128xf32>, vector<8x128xf32> -> vector<8x128xf32>
    %41 = vector.broadcast %6 : vector<1x128xf32> to vector<8x128xf32>
    %42 = arith.addf %40, %41 : vector<8x128xf32>
    %c2 = arith.constant 2 : index
    %c0_26 = arith.constant 0 : index
    %c0_27 = arith.constant 0 : index
    %43 = vector.load %arg0[%c2, %c0_26, %c0_27] : memref<3x8x128xf32, #tpu.memory_space<vmem>>, vector<1x8x128xf32>
    %44 = vector.shape_cast %43 : vector<1x8x128xf32> to vector<8x128xf32>
    %cst_28 = arith.constant dense<0.000000e+00> : vector<8x128xf32>
    %45 = tpu.matmul %42, %0, %cst_28 {dimension_numbers = #tpu.dot_dimension_numbers<[1], [0], [0], [1], [0, 0, 1, 1], [], []>} : vector<8x128xf32>, vector<128x128xf32>, vector<8x128xf32> -> vector<8x128xf32>
    %cst_29 = arith.constant dense<0.000000e+00> : vector<8x128xf32>
    %46 = tpu.matmul %44, %1, %cst_29 {dimension_numbers = #tpu.dot_dimension_numbers<[1], [0], [0], [1], [0, 0, 1, 1], [], []>} : vector<8x128xf32>, vector<128x128xf32>, vector<8x128xf32> -> vector<8x128xf32>
    %47 = arith.addf %45, %46 : vector<8x128xf32>
    %48 = vector.broadcast %2 : vector<1x128xf32> to vector<8x128xf32>
    %49 = arith.addf %47, %48 : vector<8x128xf32>
    %cst_30 = arith.constant dense<0.000000e+00> : vector<128xf32>
    %50 = vector.multi_reduction <add>, %49, %cst_30 [0] : vector<8x128xf32> to vector<128xf32>
    %51 = vector.shape_cast %50 : vector<128xf32> to vector<1x128xf32>
    %cst_31 = arith.constant 1.250000e-01 : f32
    %52 = vector.broadcast %cst_31 : f32 to vector<1x128xf32>
    %53 = arith.mulf %51, %52 : vector<1x128xf32>
    %54 = arith.mulf %49, %49 : vector<8x128xf32>
    %cst_32 = arith.constant dense<0.000000e+00> : vector<128xf32>
    %55 = vector.multi_reduction <add>, %54, %cst_32 [0] : vector<8x128xf32> to vector<128xf32>
    %56 = vector.shape_cast %55 : vector<128xf32> to vector<1x128xf32>
    %cst_33 = arith.constant 1.250000e-01 : f32
    %57 = vector.broadcast %cst_33 : f32 to vector<1x128xf32>
    %58 = arith.mulf %56, %57 : vector<1x128xf32>
    %59 = arith.mulf %53, %53 : vector<1x128xf32>
    %60 = arith.subf %58, %59 : vector<1x128xf32>
    %61 = vector.broadcast %53 : vector<1x128xf32> to vector<8x128xf32>
    %62 = arith.subf %49, %61 : vector<8x128xf32>
    %cst_34 = arith.constant 9.99999974E-6 : f32
    %63 = vector.broadcast %cst_34 : f32 to vector<1x128xf32>
    %64 = arith.addf %60, %63 : vector<1x128xf32>
    %65 = math.rsqrt %64 : vector<1x128xf32>
    %66 = vector.broadcast %65 : vector<1x128xf32> to vector<8x128xf32>
    %67 = arith.mulf %62, %66 : vector<8x128xf32>
    %68 = vector.broadcast %3 : vector<1x128xf32> to vector<8x128xf32>
    %69 = arith.mulf %67, %68 : vector<8x128xf32>
    %70 = vector.broadcast %4 : vector<1x128xf32> to vector<8x128xf32>
    %71 = arith.addf %69, %70 : vector<8x128xf32>
    %cst_35 = arith.constant 0.000000e+00 : f32
    %72 = vector.broadcast %cst_35 : f32 to vector<8x128xf32>
    %73 = arith.maximumf %71, %72 : vector<8x128xf32>
    %cst_36 = arith.constant dense<0.000000e+00> : vector<8x128xf32>
    %74 = tpu.matmul %73, %5, %cst_36 {dimension_numbers = #tpu.dot_dimension_numbers<[1], [0], [0], [1], [0, 0, 1, 1], [], []>} : vector<8x128xf32>, vector<128x128xf32>, vector<8x128xf32> -> vector<8x128xf32>
    %75 = vector.broadcast %6 : vector<1x128xf32> to vector<8x128xf32>
    %76 = arith.addf %74, %75 : vector<8x128xf32>
    %c0_37 = arith.constant 0 : index
    %c0_38 = arith.constant 0 : index
    %77 = vector.load %arg8[%c0_37, %c0_38] : memref<8x128xf32, #tpu.memory_space<vmem>>, vector<8x128xf32>
    tpu.vector_store %arg8[%c0_37, %c0_38], %76 {strides = array<i32>} : memref<8x128xf32, #tpu.memory_space<vmem>>, vector<8x128xf32>,
    return
  }
}

</mosaic_0001>

<llo_original>
// kernel: _run_fold.1
$region0: #{_run_fold.1}
  #allocation0 [shape = 'u32[]', space=smem, size = 0x4, offset = 0x4, fixed_abs, tag = 'smem constant byte address 0x4 - core index']
  #allocation1 [shape = 'u32[144,128]{1,0:T(1,128)}', space=vmem, size = 0x12000, scoped, tag = 'internal scratch']
  %s0 = inlined_call_operand.hbm [shape: f32[3,8,128], index: 0, kind: input, shape index: {}]
  %s1 = inlined_call_operand.hbm [shape: f32[128,128], index: 1, kind: input, shape index: {}]
  %s2 = inlined_call_operand.hbm [shape: f32[128,128], index: 2, kind: input, shape index: {}]
  %s3 = inlined_call_operand.vmem [shape: f32[1,128], index: 3, kind: input, shape index: {}]
  %s4 = inlined_call_operand.vmem [shape: f32[1,128], index: 4, kind: input, shape index: {}]
  %s5 = inlined_call_operand.vmem [shape: f32[1,128], index: 5, kind: input, shape index: {}]
  %s6 = inlined_call_operand.hbm [shape: f32[128,128], index: 6, kind: input, shape index: {}]
  %s7 = inlined_call_operand.vmem [shape: f32[1,128], index: 7, kind: input, shape index: {}]
  %s8 = inlined_call_operand.hbm [shape: f32[8,128], index: 8, kind: output, shape index: {}]
  %s9 = sld [smem:[#allocation0]]
  $region58: #{_run_fold.1} parent=0
    _
  %s11 = ssub.s32 1, %s9
  %s12 = scalar_select 0, %s11, %s9
  $region1: #{_run_fold.1} parent=0
    #allocation2 [shape = 'u8[12288]{0}', space=vmem, size = 0x3000, scoped, tag = 'input window, operand 0, single buffered']
    #allocation3 [shape = 's32[1]{0}', space=sflag, size = 0x4, scoped, tag = 'scoped memory for _run_fold.1']
    #allocation4 [shape = 's32[1]{0}', space=sflag, size = 0x4, scoped, tag = 'scoped memory for _run_fold.1']
    #allocation5 [shape = 'u8[65536]{0}', space=vmem, size = 0x10000, scoped, tag = 'input window, operand 1, single buffered']
    #allocation6 [shape = 's32[1]{0}', space=sflag, size = 0x4, scoped, tag = 'scoped memory for _run_fold.1']
    #allocation7 [shape = 'u8[65536]{0}', space=vmem, size = 0x10000, scoped, tag = 'input window, operand 2, single buffered']
    #allocation8 [shape = 'u8[65536]{0}', space=vmem, size = 0x10000, scoped, tag = 'input window, operand 6, single buffered']
    #allocation9 [shape = 's32[1]{0}', space=sflag, size = 0x4, scoped, tag = 'scoped memory for _run_fold.1']
    #allocation10 [shape = 'u8[4096]{0}', space=vmem, size = 0x1000, scoped, tag = 'output window, operand 0, single buffered']
    %13 = vsyncpa [#allocation3], 0
    %14 = vsyncpa [#allocation6], 0
    %15 = vsyncpa [#allocation9], 0
    %16 = vsyncpa [#allocation4], 0
    // Predicated region
    $region2: #{_run_fold.1} parent=1 // pred_check
      _
    $region3: #{_run_fold.1} parent=1 // pred_check_branch
      %18 = sbr.rel (0) target = $region5
    $region4: #{_run_fold.1} parent=1 // pred_region
      %s20 = ssub.s32 384, 384
      %21 = vsyncadd [#allocation3], %s20
      %s22 = sshll.u32 [#allocation2], 4
      %s23 = int_to_ptr.vmem [resolvable:$true] %s22
      %28 = dma.hbm_to_vmem [thread:$0]  %s0, 384, %s23, [#allocation3], 128, 128, 8
    $region5: #{_run_fold.1} parent=1 // pred_fallthru
      _
    // Predicated region
    $region6: #{_run_fold.1} parent=1 // pred_check
      _
    $region7: #{_run_fold.1} parent=1 // pred_check_branch
      %30 = sbr.rel (0) target = $region9
    $region8: #{_run_fold.1} parent=1 // pred_region
      %s32 = ssub.s32 2048, 2048
      %33 = vsyncadd [#allocation6], %s32
      %s34 = sshll.u32 [#allocation5], 4
      %s35 = int_to_ptr.vmem [resolvable:$true] %s34
      %40 = dma.hbm_to_vmem [thread:$0]  %s1, 2048, %s35, [#allocation6], 128, 128, 8
    $region9: #{_run_fold.1} parent=1 // pred_fallthru
      _
    // Predicated region
    $region10: #{_run_fold.1} parent=1 // pred_check
      _
    $region11: #{_run_fold.1} parent=1 // pred_check_branch
      %42 = sbr.rel (0) target = $region13
    $region12: #{_run_fold.1} parent=1 // pred_region
      %s44 = ssub.s32 2048, 2048
      %45 = vsyncadd [#allocation6], %s44
      %s46 = sshll.u32 [#allocation7], 4
      %s47 = int_to_ptr.vmem [resolvable:$true] %s46
      %52 = dma.hbm_to_vmem [thread:$0]  %s2, 2048, %s47, [#allocation6], 128, 128, 8
    $region13: #{_run_fold.1} parent=1 // pred_fallthru
      _
    // Predicated region
    $region14: #{_run_fold.1} parent=1 // pred_check
      _
    $region15: #{_run_fold.1} parent=1 // pred_check_branch
      %54 = sbr.rel (0) target = $region17
    $region16: #{_run_fold.1} parent=1 // pred_region
      _
    $region17: #{_run_fold.1} parent=1 // pred_fallthru
      _
    // Predicated region
    $region18: #{_run_fold.1} parent=1 // pred_check
      _
    $region19: #{_run_fold.1} parent=1 // pred_check_branch
      %56 = sbr.rel (0) target = $region21
    $region20: #{_run_fold.1} parent=1 // pred_region
      _
    $region21: #{_run_fold.1} parent=1 // pred_fallthru
      _
    // Predicated region
    $region22: #{_run_fold.1} parent=1 // pred_check
      _
    $region23: #{_run_fold.1} parent=1 // pred_check_branch
      %58 = sbr.rel (0) target = $region25
    $region24: #{_run_fold.1} parent=1 // pred_region
      _
    $region25: #{_run_fold.1} parent=1 // pred_fallthru
      _
    // Predicated region
    $region26: #{_run_fold.1} parent=1 // pred_check
      _
    $region27: #{_run_fold.1} parent=1 // pred_check_branch
      %60 = sbr.rel (0) target = $region29
    $region28: #{_run_fold.1} parent=1 // pred_region
      %s62 = ssub.s32 2048, 2048
      %63 = vsyncadd [#allocation9], %s62
      %s64 = sshll.u32 [#allocation8], 4
      %s65 = int_to_ptr.vmem [resolvable:$true] %s64
      %70 = dma.hbm_to_vmem [thread:$0]  %s6, 2048, %s65, [#allocation9], 128, 128, 8
    $region29: #{_run_fold.1} parent=1 // pred_fallthru
      _
    // Predicated region
    $region30: #{_run_fold.1} parent=1 // pred_check
      _
    $region31: #{_run_fold.1} parent=1 // pred_check_branch
      %72 = sbr.rel (0) target = $region33
    $region32: #{_run_fold.1} parent=1 // pred_region
      _
    $region33: #{_run_fold.1} parent=1 // pred_fallthru
      _
    // Predicated region
    $region34: #{_run_fold.1} parent=1 // pred_check
      _
    $region35: #{_run_fold.1} parent=1 // pred_check_branch
      %74 = sbr.rel (0) target = $region37
    $region36: #{_run_fold.1} parent=1 // pred_region
      %75 = dma.done [#allocation3], 384
    $region37: #{_run_fold.1} parent=1 // pred_fallthru
      _
    // Predicated region
    $region38: #{_run_fold.1} parent=1 // pred_check
      _
    $region39: #{_run_fold.1} parent=1 // pred_check_branch
      %77 = sbr.rel (0) target = $region41
    $region40: #{_run_fold.1} parent=1 // pred_region
      %78 = dma.done [#allocation6], 2048
    $region41: #{_run_fold.1} parent=1 // pred_fallthru
      _
    // Predicated region
    $region42: #{_run_fold.1} parent=1 // pred_check
      _
    $region43: #{_run_fold.1} parent=1 // pred_check_branch
      %80 = sbr.rel (0) target = $region45
    $region44: #{_run_fold.1} parent=1 // pred_region
      %81 = dma.done [#allocation6], 2048
    $region45: #{_run_fold.1} parent=1 // pred_fallthru
      _
    // Predicated region
    $region46: #{_run_fold.1} parent=1 // pred_check
      _
    $region47: #{_run_fold.1} parent=1 // pred_check_branch
      %83 = sbr.rel (0) target = $region49
    $region48: #{_run_fold.1} parent=1 // pred_region
      %84 = dma.done [#allocation9], 2048
    $region49: #{_run_fold.1} parent=1 // pred_fallthru
      _
    %v85 = vld [vmem:[#allocation5] sm:$0xff]
    %v86 = vld [vmem:[#allocation5 + $0x8] sm:$0xff]
    %v87 = vld [vmem:[#allocation5 + $0x10] sm:$0xff]
    %v88 = vld [vmem:[#allocation5 + $0x18] sm:$0xff]
    %v89 = vld [vmem:[#allocation5 + $0x20] sm:$0xff]
    %v90 = vld [vmem:[#allocation5 + $0x28] sm:$0xff]
    %v91 = vld [vmem:[#allocation5 + $0x30] sm:$0xff]
    %v92 = vld [vmem:[#allocation5 + $0x38] sm:$0xff]
    %v93 = vld [vmem:[#allocation5 + $0x40] sm:$0xff]
    %v94 = vld [vmem:[#allocation5 + $0x48] sm:$0xff]
    %v95 = vld [vmem:[#allocation5 + $0x50] sm:$0xff]
    %v96 = vld [vmem:[#allocation5 + $0x58] sm:$0xff]
    %v97 = vld [vmem:[#allocation5 + $0x60] sm:$0xff]
    %v98 = vld [vmem:[#allocation5 + $0x68] sm:$0xff]
    %v99 = vld [vmem:[#allocation5 + $0x70] sm:$0xff]
    %v100 = vld [vmem:[#allocation5 + $0x78] sm:$0xff]
    %v101 = vld [vmem:[#allocation7] sm:$0xff]
    %v102 = vld [vmem:[#allocation7 + $0x8] sm:$0xff]
    %v103 = vld [vmem:[#allocation7 + $0x10] sm:$0xff]
    %v104 = vld [vmem:[#allocation7 + $0x18] sm:$0xff]
    %v105 = vld [vmem:[#allocation7 + $0x20] sm:$0xff]
    %v106 = vld [vmem:[#allocation7 + $0x28] sm:$0xff]
    %v107 = vld [vmem:[#allocation7 + $0x30] sm:$0xff]
    %v108 = vld [vmem:[#allocation7 + $0x38] sm:$0xff]
    %v109 = vld [vmem:[#allocation7 + $0x40] sm:$0xff]
    %v110 = vld [vmem:[#allocation7 + $0x48] sm:$0xff]
    %v111 = vld [vmem:[#allocation7 + $0x50] sm:$0xff]
    %v112 = vld [vmem:[#allocation7 + $0x58] sm:$0xff]
    %v113 = vld [vmem:[#allocation7 + $0x60] sm:$0xff]
    %v114 = vld [vmem:[#allocation7 + $0x68] sm:$0xff]
    %v115 = vld [vmem:[#allocation7 + $0x70] sm:$0xff]
    %v116 = vld [vmem:[#allocation7 + $0x78] sm:$0xff]
    %v117 = vld [vmem:[%s3] sm:$0x1]
    %v118 = vld [vmem:[%s4] sm:$0x1]
    %v119 = vld [vmem:[%s5] sm:$0x1]
    %v120 = vld [vmem:[#allocation8] sm:$0xff]
    %v121 = vld [vmem:[#allocation8 + $0x8] sm:$0xff]
    %v122 = vld [vmem:[#allocation8 + $0x10] sm:$0xff]
    %v123 = vld [vmem:[#allocation8 + $0x18] sm:$0xff]
    %v124 = vld [vmem:[#allocation8 + $0x20] sm:$0xff]
    %v125 = vld [vmem:[#allocation8 + $0x28] sm:$0xff]
    %v126 = vld [vmem:[#allocation8 + $0x30] sm:$0xff]
    %v127 = vld [vmem:[#allocation8 + $0x38] sm:$0xff]
    %v128 = vld [vmem:[#allocation8 + $0x40] sm:$0xff]
    %v129 = vld [vmem:[#allocation8 + $0x48] sm:$0xff]
    %v130 = vld [vmem:[#allocation8 + $0x50] sm:$0xff]
    %v131 = vld [vmem:[#allocation8 + $0x58] sm:$0xff]
    %v132 = vld [vmem:[#allocation8 + $0x60] sm:$0xff]
    %v133 = vld [vmem:[#allocation8 + $0x68] sm:$0xff]
    %v134 = vld [vmem:[#allocation8 + $0x70] sm:$0xff]
    %v135 = vld [vmem:[#allocation8 + $0x78] sm:$0xff]
    %v136 = vld [vmem:[%s7] sm:$0x1]
    %v137 = vld [vmem:[#allocation2] sm:$0xff]
    %s138 = scalar_lea.vmem [#allocation2], 8
    %v139 = vld [vmem:[%s138] sm:$0xff]
    %140 = vmatprep.subr.mxu0 0.0
    %141 = vmatpush1.msra.mxu0 %v101
    %142 = vmatprep.subr.mxu0 0.0
    %143 = vmatpush1.msra.mxu0 %v102
    %144 = vmatprep.subr.mxu0 0.0
    %145 = vmatpush1.msra.mxu0 %v103
    %146 = vmatprep.subr.mxu0 0.0
    %147 = vmatpush1.msra.mxu0 %v104
    %148 = vmatprep.subr.mxu0 0.0
    %149 = vmatpush1.msra.mxu0 %v105
    %150 = vmatprep.subr.mxu0 0.0
    %151 = vmatpush1.msra.mxu0 %v106
    %152 = vmatprep.subr.mxu0 0.0
    %153 = vmatpush1.msra.mxu0 %v107
    %154 = vmatprep.subr.mxu0 0.0
    %155 = vmatpush1.msra.mxu0 %v108
    %156 = vmatprep.subr.mxu0 0.0
    %157 = vmatpush1.msra.mxu0 %v109
    %158 = vmatprep.subr.mxu0 0.0
    %159 = vmatpush1.msra.mxu0 %v110
    %160 = vmatprep.subr.mxu0 0.0
    %161 = vmatpush1.msra.mxu0 %v111
    %162 = vmatprep.subr.mxu0 0.0
    %163 = vmatpush1.msra.mxu0 %v112
    %164 = vmatprep.subr.mxu0 0.0
    %165 = vmatpush1.msra.mxu0 %v113
    %166 = vmatprep.subr.mxu0 0.0
    %167 = vmatpush1.msra.mxu0 %v114
    %168 = vmatprep.subr.mxu0 0.0
    %169 = vmatpush1.msra.mxu0 %v115
    %170 = vmatprep.subr.mxu0 0.0
    %171 = vmatpush1.msra.mxu0 %v116
    %172 = vmatprep.subr.mxu0 0.0
    %173 = vmatpush1.msra.mxu0 0.0
    %174 = vmatprep.subr.mxu0 0.0
    %175 = vmatpush1.msra.mxu0 0.0
    %176 = vmatprep.subr.mxu0 0.0
    %177 = vmatpush1.msra.mxu0 0.0
    %178 = vmatprep.subr.mxu0 0.0
    %179 = vmatpush1.msra.mxu0 0.0
    %180 = vmatprep.subr.mxu0 0.0
    %181 = vmatpush1.msra.mxu0 0.0
    %182 = vmatprep.subr.mxu0 0.0
    %183 = vmatpush1.msra.mxu0 0.0
    %184 = vmatprep.subr.mxu0 0.0
    %185 = vmatpush1.msra.mxu0 0.0
    %186 = vmatprep.subr.mxu0 0.0
    %187 = vmatpush1.msra.mxu0 0.0
    %188 = vmatprep.subr.mxu0 0.0
    %189 = vmatpush1.msra.mxu0 0.0
    %190 = vmatprep.subr.mxu0 0.0
    %191 = vmatpush1.msra.mxu0 0.0
    %192 = vmatprep.subr.mxu0 0.0
    %193 = vmatpush1.msra.mxu0 0.0
    %194 = vmatprep.subr.mxu0 0.0
    %195 = vmatpush1.msra.mxu0 0.0
    %196 = vmatprep.subr.mxu0 0.0
    %197 = vmatpush1.msra.mxu0 0.0
    %198 = vmatprep.subr.mxu0 0.0
    %199 = vmatpush1.msra.mxu0 0.0
    %200 = vmatprep.subr.mxu0 0.0
    %201 = vmatpush1.msra.mxu0 0.0
    %202 = vmatprep.subr.mxu0 0.0
    %203 = vmatpush1.msra.mxu0 0.0
    %204 = vmatprep.mubr.f32.mxu0 0.0
    %205 = vmatmul.mubr.f32.gmra.mrb[0].mxu0 %v139
    %v206 = vpop.f32.mrb[0].mxu0
    %v207 = vadd.f32 0.0, %v206
    %v208 = vpop.f32.mrb[0].mxu0
    %209 = vdwg.mxu0
    %210 = vmatprep.subr.mxu0 0.0
    %211 = vmatpush1.msra.mxu0 %v85
    %212 = vmatprep.subr.mxu0 0.0
    %213 = vmatpush1.msra.mxu0 %v86
    %214 = vmatprep.subr.mxu0 0.0
    %215 = vmatpush1.msra.mxu0 %v87
    %216 = vmatprep.subr.mxu0 0.0
    %217 = vmatpush1.msra.mxu0 %v88
    %218 = vmatprep.subr.mxu0 0.0
    %219 = vmatpush1.msra.mxu0 %v89
    %220 = vmatprep.subr.mxu0 0.0
    %221 = vmatpush1.msra.mxu0 %v90
    %222 = vmatprep.subr.mxu0 0.0
    %223 = vmatpush1.msra.mxu0 %v91
    %224 = vmatprep.subr.mxu0 0.0
    %225 = vmatpush1.msra.mxu0 %v92
    %226 = vmatprep.subr.mxu0 0.0
    %227 = vmatpush1.msra.mxu0 %v93
    %228 = vmatprep.subr.mxu0 0.0
    %229 = vmatpush1.msra.mxu0 %v94
    %230 = vmatprep.subr.mxu0 0.0
    %231 = vmatpush1.msra.mxu0 %v95
    %232 = vmatprep.subr.mxu0 0.0
    %233 = vmatpush1.msra.mxu0 %v96
    %234 = vmatprep.subr.mxu0 0.0
    %235 = vmatpush1.msra.mxu0 %v97
    %236 = vmatprep.subr.mxu0 0.0
    %237 = vmatpush1.msra.mxu0 %v98
    %238 = vmatprep.subr.mxu0 0.0
    %239 = vmatpush1.msra.mxu0 %v99
    %240 = vmatprep.subr.mxu0 0.0
    %241 = vmatpush1.msra.mxu0 %v100
    %242 = vmatprep.subr.mxu0 0.0
    %243 = vmatpush1.msra.mxu0 0.0
    %244 = vmatprep.subr.mxu0 0.0
    %245 = vmatpush1.msra.mxu0 0.0
    %246 = vmatprep.subr.mxu0 0.0
    %247 = vmatpush1.msra.mxu0 0.0
    %248 = vmatprep.subr.mxu0 0.0
    %249 = vmatpush1.msra.mxu0 0.0
    %250 = vmatprep.subr.mxu0 0.0
    %251 = vmatpush1.msra.mxu0 0.0
    %252 = vmatprep.subr.mxu0 0.0
    %253 = vmatpush1.msra.mxu0 0.0
    %254 = vmatprep.subr.mxu0 0.0
    %255 = vmatpush1.msra.mxu0 0.0
    %256 = vmatprep.subr.mxu0 0.0
    %257 = vmatpush1.msra.mxu0 0.0
    %258 = vmatprep.subr.mxu0 0.0
    %259 = vmatpush1.msra.mxu0 0.0
    %260 = vmatprep.subr.mxu0 0.0
    %261 = vmatpush1.msra.mxu0 0.0
    %262 = vmatprep.subr.mxu0 0.0
    %263 = vmatpush1.msra.mxu0 0.0
    %264 = vmatprep.subr.mxu0 0.0
    %265 = vmatpush1.msra.mxu0 0.0
    %266 = vmatprep.subr.mxu0 0.0
    %267 = vmatpush1.msra.mxu0 0.0
    %268 = vmatprep.subr.mxu0 0.0
    %269 = vmatpush1.msra.mxu0 0.0
    %270 = vmatprep.subr.mxu0 0.0
    %271 = vmatpush1.msra.mxu0 0.0
    %272 = vmatprep.subr.mxu0 0.0
    %273 = vmatpush1.msra.mxu0 0.0
    %274 = vmatprep.mubr.f32.mxu0 0.0
    %275 = vmatmul.mubr.f32.gmra.mrb[0].mxu0 %v137
    %v276 = vpop.f32.mrb[0].mxu0
    %v277 = vadd.f32 %v207, %v276
    %v278 = vpop.f32.mrb[0].mxu0
    %279 = vdwg.mxu0
    %v281 = vlaneseq
    %v282 = vshrl.u32 %v281, 7
    %v283 = vsub.s32 0, %v282
    %v284 = vrot.slane %v117, %v283
    %v286 = vadd.f32 %v277, %v284
    %v287 = vrot.slane %v286, 4
    %v288 = vadd.f32 %v286, %v287
    %v289 = vrot.slane %v288, 2
    %v290 = vadd.f32 %v288, %v289
    %v291 = vrot.slane %v290, 1
    %v292 = vadd.f32 %v290, %v291
    %v293 = vmul.f32 %v292, 0.125
    %v294 = vmul.f32 %v286, %v286
    %v295 = vrot.slane %v294, 4
    %v296 = vadd.f32 %v294, %v295
    %v297 = vrot.slane %v296, 2
    %v298 = vadd.f32 %v296, %v297
    %v299 = vrot.slane %v298, 1
    %v300 = vadd.f32 %v298, %v299
    %v301 = vmul.f32 %v300, 0.125
    %v302 = vmul.f32 %v293, %v293
    %v303 = vsub.f32 %v301, %v302
    %v304 = vsub.f32 %v286, %v293
    %v305 = vadd.f32 %v303, 1e-05
    %v306 = vrsqrt.pop %v305
    %v307 = vmul.f32 %v304, %v306
    %v309 = vlaneseq
    %v310 = vshrl.u32 %v309, 7
    %v311 = vsub.s32 0, %v310
    %v312 = vrot.slane %v118, %v311
    %v314 = vmul.f32 %v307, %v312
    %v316 = vlaneseq
    %v317 = vshrl.u32 %v316, 7
    %v318 = vsub.s32 0, %v317
    %v319 = vrot.slane %v119, %v318
    %v321 = vadd.f32 %v314, %v319
    %v322 = vmax.f32 %v321, 0.0
    %v324 = vlaneseq
    %v325 = vshrl.u32 %v324, 7
    %v326 = vsub.s32 0, %v325
    %v327 = vrot.slane %v136, %v326
    %329 = vmatprep.subr.mxu0 0.0
    %330 = vmatpush1.msra.mxu0 %v120
    %331 = vmatprep.subr.mxu0 0.0
    %332 = vmatpush1.msra.mxu0 %v121
    %333 = vmatprep.subr.mxu0 0.0
    %334 = vmatpush1.msra.mxu0 %v122
    %335 = vmatprep.subr.mxu0 0.0
    %336 = vmatpush1.msra.mxu0 %v123
    %337 = vmatprep.subr.mxu0 0.0
    %338 = vmatpush1.msra.mxu0 %v124
    %339 = vmatprep.subr.mxu0 0.0
    %340 = vmatpush1.msra.mxu0 %v125
    %341 = vmatprep.subr.mxu0 0.0
    %342 = vmatpush1.msra.mxu0 %v126
    %343 = vmatprep.subr.mxu0 0.0
    %344 = vmatpush1.msra.mxu0 %v127
    %345 = vmatprep.subr.mxu0 0.0
    %346 = vmatpush1.msra.mxu0 %v128
    %347 = vmatprep.subr.mxu0 0.0
    %348 = vmatpush1.msra.mxu0 %v129
    %349 = vmatprep.subr.mxu0 0.0
    %350 = vmatpush1.msra.mxu0 %v130
    %351 = vmatprep.subr.mxu0 0.0
    %352 = vmatpush1.msra.mxu0 %v131
    %353 = vmatprep.subr.mxu0 0.0
    %354 = vmatpush1.msra.mxu0 %v132
    %355 = vmatprep.subr.mxu0 0.0
    %356 = vmatpush1.msra.mxu0 %v133
    %357 = vmatprep.subr.mxu0 0.0
    %358 = vmatpush1.msra.mxu0 %v134
    %359 = vmatprep.subr.mxu0 0.0
    %360 = vmatpush1.msra.mxu0 %v135
    %361 = vmatprep.subr.mxu0 0.0
    %362 = vmatpush1.msra.mxu0 0.0
    %363 = vmatprep.subr.mxu0 0.0
    %364 = vmatpush1.msra.mxu0 0.0
    %365 = vmatprep.subr.mxu0 0.0
    %366 = vmatpush1.msra.mxu0 0.0
    %367 = vmatprep.subr.mxu0 0.0
    %368 = vmatpush1.msra.mxu0 0.0
    %369 = vmatprep.subr.mxu0 0.0
    %370 = vmatpush1.msra.mxu0 0.0
    %371 = vmatprep.subr.mxu0 0.0
    %372 = vmatpush1.msra.mxu0 0.0
    %373 = vmatprep.subr.mxu0 0.0
    %374 = vmatpush1.msra.mxu0 0.0
    %375 = vmatprep.subr.mxu0 0.0
    %376 = vmatpush1.msra.mxu0 0.0
    %377 = vmatprep.subr.mxu0 0.0
    %378 = vmatpush1.msra.mxu0 0.0
    %379 = vmatprep.subr.mxu0 0.0
    %380 = vmatpush1.msra.mxu0 0.0
    %381 = vmatprep.subr.mxu0 0.0
    %382 = vmatpush1.msra.mxu0 0.0
    %383 = vmatprep.subr.mxu0 0.0
    %384 = vmatpush1.msra.mxu0 0.0
    %385 = vmatprep.subr.mxu0 0.0
    %386 = vmatpush1.msra.mxu0 0.0
    %387 = vmatprep.subr.mxu0 0.0
    %388 = vmatpush1.msra.mxu0 0.0
    %389 = vmatprep.subr.mxu0 0.0
    %390 = vmatpush1.msra.mxu0 0.0
    %391 = vmatprep.subr.mxu0 0.0
    %392 = vmatpush1.msra.mxu0 0.0
    %393 = vmatprep.mubr.f32.mxu0 0.0
    %394 = vmatmul.mubr.f32.gmra.mrb[0].mxu0 %v322
    %v395 = vpop.f32.mrb[0].mxu0
    %v396 = vadd.f32 %v327, %v395
    %v397 = vpop.f32.mrb[0].mxu0
    %398 = vdwg.mxu0
    %s399 = scalar_lea.vmem [#allocation2], 16
    %v400 = vld [vmem:[%s399] sm:$0xff]
    %401 = vmatprep.subr.mxu0 0.0
    %402 = vmatpush1.msra.mxu0 %v101
    %403 = vmatprep.subr.mxu0 0.0
    %404 = vmatpush1.msra.mxu0 %v102
    %405 = vmatprep.subr.mxu0 0.0
    %406 = vmatpush1.msra.mxu0 %v103
    %407 = vmatprep.subr.mxu0 0.0
    %408 = vmatpush1.msra.mxu0 %v104
    %409 = vmatprep.subr.mxu0 0.0
    %410 = vmatpush1.msra.mxu0 %v105
    %411 = vmatprep.subr.mxu0 0.0
    %412 = vmatpush1.msra.mxu0 %v106
    %413 = vmatprep.subr.mxu0 0.0
    %414 = vmatpush1.msra.mxu0 %v107
    %415 = vmatprep.subr.mxu0 0.0
    %416 = vmatpush1.msra.mxu0 %v108
    %417 = vmatprep.subr.mxu0 0.0
    %418 = vmatpush1.msra.mxu0 %v109
    %419 = vmatprep.subr.mxu0 0.0
    %420 = vmatpush1.msra.mxu0 %v110
    %421 = vmatprep.subr.mxu0 0.0
    %422 = vmatpush1.msra.mxu0 %v111
    %423 = vmatprep.subr.mxu0 0.0
    %424 = vmatpush1.msra.mxu0 %v112
    %425 = vmatprep.subr.mxu0 0.0
    %426 = vmatpush1.msra.mxu0 %v113
    %427 = vmatprep.subr.mxu0 0.0
    %428 = vmatpush1.msra.mxu0 %v114
    %429 = vmatprep.subr.mxu0 0.0
    %430 = vmatpush1.msra.mxu0 %v115
    %431 = vmatprep.subr.mxu0 0.0
    %432 = vmatpush1.msra.mxu0 %v116
    %433 = vmatprep.subr.mxu0 0.0
    %434 = vmatpush1.msra.mxu0 0.0
    %435 = vmatprep.subr.mxu0 0.0
    %436 = vmatpush1.msra.mxu0 0.0
    %437 = vmatprep.subr.mxu0 0.0
    %438 = vmatpush1.msra.mxu0 0.0
    %439 = vmatprep.subr.mxu0 0.0
    %440 = vmatpush1.msra.mxu0 0.0
    %441 = vmatprep.subr.mxu0 0.0
    %442 = vmatpush1.msra.mxu0 0.0
    %443 = vmatprep.subr.mxu0 0.0
    %444 = vmatpush1.msra.mxu0 0.0
    %445 = vmatprep.subr.mxu0 0.0
    %446 = vmatpush1.msra.mxu0 0.0
    %447 = vmatprep.subr.mxu0 0.0
    %448 = vmatpush1.msra.mxu0 0.0
    %449 = vmatprep.subr.mxu0 0.0
    %450 = vmatpush1.msra.mxu0 0.0
    %451 = vmatprep.subr.mxu0 0.0
    %452 = vmatpush1.msra.mxu0 0.0
    %453 = vmatprep.subr.mxu0 0.0
    %454 = vmatpush1.msra.mxu0 0.0
    %455 = vmatprep.subr.mxu0 0.0
    %456 = vmatpush1.msra.mxu0 0.0
    %457 = vmatprep.subr.mxu0 0.0
    %458 = vmatpush1.msra.mxu0 0.0
    %459 = vmatprep.subr.mxu0 0.0
    %460 = vmatpush1.msra.mxu0 0.0
    %461 = vmatprep.subr.mxu0 0.0
    %462 = vmatpush1.msra.mxu0 0.0
    %463 = vmatprep.subr.mxu0 0.0
    %464 = vmatpush1.msra.mxu0 0.0
    %465 = vmatprep.mubr.f32.mxu0 0.0
    %466 = vmatmul.mubr.f32.gmra.mrb[0].mxu0 %v400
    %v467 = vpop.f32.mrb[0].mxu0
    %v468 = vadd.f32 0.0, %v467
    %v469 = vpop.f32.mrb[0].mxu0
    %470 = vdwg.mxu0
    %471 = vmatprep.subr.mxu0 0.0
    %472 = vmatpush1.msra.mxu0 %v85
    %473 = vmatprep.subr.mxu0 0.0
    %474 = vmatpush1.msra.mxu0 %v86
    %475 = vmatprep.subr.mxu0 0.0
    %476 = vmatpush1.msra.mxu0 %v87
    %477 = vmatprep.subr.mxu0 0.0
    %478 = vmatpush1.msra.mxu0 %v88
    %479 = vmatprep.subr.mxu0 0.0
    %480 = vmatpush1.msra.mxu0 %v89
    %481 = vmatprep.subr.mxu0 0.0
    %482 = vmatpush1.msra.mxu0 %v90
    %483 = vmatprep.subr.mxu0 0.0
    %484 = vmatpush1.msra.mxu0 %v91
    %485 = vmatprep.subr.mxu0 0.0
    %486 = vmatpush1.msra.mxu0 %v92
    %487 = vmatprep.subr.mxu0 0.0
    %488 = vmatpush1.msra.mxu0 %v93
    %489 = vmatprep.subr.mxu0 0.0
    %490 = vmatpush1.msra.mxu0 %v94
    %491 = vmatprep.subr.mxu0 0.0
    %492 = vmatpush1.msra.mxu0 %v95
    %493 = vmatprep.subr.mxu0 0.0
    %494 = vmatpush1.msra.mxu0 %v96
    %495 = vmatprep.subr.mxu0 0.0
    %496 = vmatpush1.msra.mxu0 %v97
    %497 = vmatprep.subr.mxu0 0.0
    %498 = vmatpush1.msra.mxu0 %v98
    %499 = vmatprep.subr.mxu0 0.0
    %500 = vmatpush1.msra.mxu0 %v99
    %501 = vmatprep.subr.mxu0 0.0
    %502 = vmatpush1.msra.mxu0 %v100
    %503 = vmatprep.subr.mxu0 0.0
    %504 = vmatpush1.msra.mxu0 0.0
    %505 = vmatprep.subr.mxu0 0.0
    %506 = vmatpush1.msra.mxu0 0.0
    %507 = vmatprep.subr.mxu0 0.0
    %508 = vmatpush1.msra.mxu0 0.0
    %509 = vmatprep.subr.mxu0 0.0
    %510 = vmatpush1.msra.mxu0 0.0
    %511 = vmatprep.subr.mxu0 0.0
    %512 = vmatpush1.msra.mxu0 0.0
    %513 = vmatprep.subr.mxu0 0.0
    %514 = vmatpush1.msra.mxu0 0.0
    %515 = vmatprep.subr.mxu0 0.0
    %516 = vmatpush1.msra.mxu0 0.0
    %517 = vmatprep.subr.mxu0 0.0
    %518 = vmatpush1.msra.mxu0 0.0
    %519 = vmatprep.subr.mxu0 0.0
    %520 = vmatpush1.msra.mxu0 0.0
    %521 = vmatprep.subr.mxu0 0.0
    %522 = vmatpush1.msra.mxu0 0.0
    %523 = vmatprep.subr.mxu0 0.0
    %524 = vmatpush1.msra.mxu0 0.0
    %525 = vmatprep.subr.mxu0 0.0
    %526 = vmatpush1.msra.mxu0 0.0
    %527 = vmatprep.subr.mxu0 0.0
    %528 = vmatpush1.msra.mxu0 0.0
    %529 = vmatprep.subr.mxu0 0.0
    %530 = vmatpush1.msra.mxu0 0.0
    %531 = vmatprep.subr.mxu0 0.0
    %532 = vmatpush1.msra.mxu0 0.0
    %533 = vmatprep.subr.mxu0 0.0
    %534 = vmatpush1.msra.mxu0 0.0
    %535 = vmatprep.mubr.f32.mxu0 0.0
    %536 = vmatmul.mubr.f32.gmra.mrb[0].mxu0 %v396
    %v537 = vpop.f32.mrb[0].mxu0
    %v538 = vadd.f32 %v468, %v537
    %v539 = vpop.f32.mrb[0].mxu0
    %540 = vdwg.mxu0
    %v541 = vadd.f32 %v538, %v284
    %v542 = vrot.slane %v541, 4
    %v543 = vadd.f32 %v541, %v542
    %v544 = vrot.slane %v543, 2
    %v545 = vadd.f32 %v543, %v544
    %v546 = vrot.slane %v545, 1
    %v547 = vadd.f32 %v545, %v546
    %v548 = vmul.f32 %v547, 0.125
    %v549 = vmul.f32 %v541, %v541
    %v550 = vrot.slane %v549, 4
    %v551 = vadd.f32 %v549, %v550
    %v552 = vrot.slane %v551, 2
    %v553 = vadd.f32 %v551, %v552
    %v554 = vrot.slane %v553, 1
    %v555 = vadd.f32 %v553, %v554
    %v556 = vmul.f32 %v555, 0.125
    %v557 = vmul.f32 %v548, %v548
    %v558 = vsub.f32 %v556, %v557
    %v559 = vsub.f32 %v541, %v548
    %v560 = vadd.f32 %v558, 1e-05
    %v561 = vrsqrt.pop %v560
    %v562 = vmul.f32 %v559, %v561
    %v563 = vmul.f32 %v562, %v312
    %v564 = vadd.f32 %v563, %v319
    %v565 = vmax.f32 %v564, 0.0
    %566 = vmatprep.subr.mxu0 0.0
    %567 = vmatpush1.msra.mxu0 %v120
    %568 = vmatprep.subr.mxu0 0.0
    %569 = vmatpush1.msra.mxu0 %v121
    %570 = vmatprep.subr.mxu0 0.0
    %571 = vmatpush1.msra.mxu0 %v122
    %572 = vmatprep.subr.mxu0 0.0
    %573 = vmatpush1.msra.mxu0 %v123
    %574 = vmatprep.subr.mxu0 0.0
    %575 = vmatpush1.msra.mxu0 %v124
    %576 = vmatprep.subr.mxu0 0.0
    %577 = vmatpush1.msra.mxu0 %v125
    %578 = vmatprep.subr.mxu0 0.0
    %579 = vmatpush1.msra.mxu0 %v126
    %580 = vmatprep.subr.mxu0 0.0
    %581 = vmatpush1.msra.mxu0 %v127
    %582 = vmatprep.subr.mxu0 0.0
    %583 = vmatpush1.msra.mxu0 %v128
    %584 = vmatprep.subr.mxu0 0.0
    %585 = vmatpush1.msra.mxu0 %v129
    %586 = vmatprep.subr.mxu0 0.0
    %587 = vmatpush1.msra.mxu0 %v130
    %588 = vmatprep.subr.mxu0 0.0
    %589 = vmatpush1.msra.mxu0 %v131
    %590 = vmatprep.subr.mxu0 0.0
    %591 = vmatpush1.msra.mxu0 %v132
    %592 = vmatprep.subr.mxu0 0.0
    %593 = vmatpush1.msra.mxu0 %v133
    %594 = vmatprep.subr.mxu0 0.0
    %595 = vmatpush1.msra.mxu0 %v134
    %596 = vmatprep.subr.mxu0 0.0
    %597 = vmatpush1.msra.mxu0 %v135
    %598 = vmatprep.subr.mxu0 0.0
    %599 = vmatpush1.msra.mxu0 0.0
    %600 = vmatprep.subr.mxu0 0.0
    %601 = vmatpush1.msra.mxu0 0.0
    %602 = vmatprep.subr.mxu0 0.0
    %603 = vmatpush1.msra.mxu0 0.0
    %604 = vmatprep.subr.mxu0 0.0
    %605 = vmatpush1.msra.mxu0 0.0
    %606 = vmatprep.subr.mxu0 0.0
    %607 = vmatpush1.msra.mxu0 0.0
    %608 = vmatprep.subr.mxu0 0.0
    %609 = vmatpush1.msra.mxu0 0.0
    %610 = vmatprep.subr.mxu0 0.0
    %611 = vmatpush1.msra.mxu0 0.0
    %612 = vmatprep.subr.mxu0 0.0
    %613 = vmatpush1.msra.mxu0 0.0
    %614 = vmatprep.subr.mxu0 0.0
    %615 = vmatpush1.msra.mxu0 0.0
    %616 = vmatprep.subr.mxu0 0.0
    %617 = vmatpush1.msra.mxu0 0.0
    %618 = vmatprep.subr.mxu0 0.0
    %619 = vmatpush1.msra.mxu0 0.0
    %620 = vmatprep.subr.mxu0 0.0
    %621 = vmatpush1.msra.mxu0 0.0
    %622 = vmatprep.subr.mxu0 0.0
    %623 = vmatpush1.msra.mxu0 0.0
    %624 = vmatprep.subr.mxu0 0.0
    %625 = vmatpush1.msra.mxu0 0.0
    %626 = vmatprep.subr.mxu0 0.0
    %627 = vmatpush1.msra.mxu0 0.0
    %628 = vmatprep.subr.mxu0 0.0
    %629 = vmatpush1.msra.mxu0 0.0
    %630 = vmatprep.mubr.f32.mxu0 0.0
    %631 = vmatmul.mubr.f32.gmra.mrb[0].mxu0 %v565
    %v632 = vpop.f32.mrb[0].mxu0
    %v633 = vadd.f32 %v327, %v632
    %v634 = vpop.f32.mrb[0].mxu0
    %635 = vdwg.mxu0
    %636 = vst [vmem:[#allocation10] sm:$0xff] %v633
    // Predicated region
    $region50: #{_run_fold.1} parent=1 // pred_check
      _
    $region51: #{_run_fold.1} parent=1 // pred_check_branch
      %638 = sbr.rel (0) target = $region53
    $region52: #{_run_fold.1} parent=1 // pred_region
      %s640 = ssub.s32 128, 128
      %641 = vsyncadd [#allocation4], %s640
      %s643 = sshll.u32 [#allocation10], 4
      %s644 = int_to_ptr.vmem [resolvable:$true] %s643
      %646 = dma.vmem_to_hbm [thread:$0]  %s644, 128, %s8, [#allocation4]
    $region53: #{_run_fold.1} parent=1 // pred_fallthru
      _
    // Predicated region
    $region54: #{_run_fold.1} parent=1 // pred_check
      _
    $region55: #{_run_fold.1} parent=1 // pred_check_branch
      %648 = sbr.rel (0) target = $region57
    $region56: #{_run_fold.1} parent=1 // pred_region
      %649 = dma.done [#allocation4], 128
    $region57: #{_run_fold.1} parent=1 // pred_fallthru
      _
    %650 = vsyncpa [#allocation3], 1
    %651 = vsyncpa [#allocation6], 1
    %652 = vsyncpa [#allocation9], 1
    %653 = vsyncpa [#allocation4], 1

</llo_original>
